<compile_context>
chip_gen: v6e
topology: v6e:2x2x1
jax: 0.10.0
libtpu: 0.0.40
codegen_flags: <defaults>
</compile_context>

<pallas_src>
import jax
import jax.numpy as jnp
from jax.experimental import pallas as pl
from jax.experimental.pallas import tpu as pltpu

_LANES = 128
# 8192 rows x 128 lanes x 4 B = 4 MiB per f32 block (double-buffered by Pallas).
_MAX_TILE_ROWS = 8192


def _scale_kernel(scale_ref, x_ref, o_ref):
    # scale: (1,) scalar in SMEM; x/o: lane-dense (tile_rows, 128) tiles in VMEM.
    o_ref[...] = (x_ref[...] * scale_ref[0]).astype(o_ref.dtype)


def _round_up(n, m):
    return ((n + m - 1) // m) * m


def model_forward(x, w1, w2, w3):
    """Forward of Model: fc3(fc2(fc1(x))) with 1x1 bias-free Linears.

    x: (..., 1); w1/w2/w3: (1, 1) weights.
    Implemented as a lane-dense, tiled, pipelined elementwise scale:
    y = x * (w1 * w2 * w3).
    """
    orig_shape = x.shape
    orig_dtype = x.dtype
    n = x.size

    # Fold the three 1x1 weights into a single scalar (done once, on 3 elems).
    scale = (w1.reshape(()) * w2.reshape(()) * w3.reshape(())).astype(jnp.float32)
    scale = scale.reshape((1,))

    # Lane-dense view: flat data as (rows, 128).  Pad only to a lane multiple
    # (at most 127 elements), never to a full tile; Pallas masks partial
    # row-tiles at the grid boundary automatically.
    padded_n = _round_up(max(n, 1), _LANES)
    rows = padded_n // _LANES
    needs_pad = padded_n != n

    x_flat = x.reshape(-1)
    if needs_pad:
        # TODO(synk): this pad (and the matching output slice) is one extra HBM
        # copy each; it is only taken when n is not a multiple of 128.
        x_flat = jnp.pad(x_flat, (0, padded_n - n))
    x2d = x_flat.reshape(rows, _LANES)

    if rows <= _MAX_TILE_ROWS:
        # Single block equal to the full array dims -> always a legal tile,
        # regardless of dtype or row count.
        tile_rows = rows
    else:
        # Multiple of 32 sublanes -> legal min-tile for f32 / bf16 / int8.
        tile_rows = _MAX_TILE_ROWS

    grid = (pl.cdiv(rows, tile_rows),)

    y2d = pl.pallas_call(
        _scale_kernel,
        out_shape=jax.ShapeDtypeStruct((rows, _LANES), orig_dtype),
        grid_spec=pl.GridSpec(
            grid=grid,
            in_specs=[
                pl.BlockSpec(memory_space=pltpu.SMEM),                 # folded weight
                pl.BlockSpec((tile_rows, _LANES), lambda i: (i, 0)),   # x tile
            ],
            out_specs=pl.BlockSpec((tile_rows, _LANES), lambda i: (i, 0)),
        ),
        compiler_params=pltpu.CompilerParams(
            dimension_semantics=("parallel",),   # megacore / 2-TC sharding on v7x
            vmem_limit_bytes=48 << 20,           # 16 MiB live blocks + headroom
        ),
    )(scale, x2d)

    y_flat = y2d.reshape(-1)
    if needs_pad:
        y_flat = y_flat[:n]
    return y_flat.reshape(orig_shape)


if __name__ == "__main__":
    key = jax.random.PRNGKey(0)

    # Deterministic parameter init, exactly as in the module's __init__.
    w1 = jnp.full((1, 1), 1.0, dtype=jnp.float32)  # fc1.weight
    w2 = jnp.full((1, 1), 2.0, dtype=jnp.float32)  # fc2.weight
    w3 = jnp.full((1, 1), 3.0, dtype=jnp.float32)  # fc3.weight

    k1, k2, k3 = jax.random.split(key, 3)

    # Small case matching the module's (B, 1) input convention (pad path,
    # single full-array block).
    B = 8
    x_small = jax.random.normal(k1, (B, 1), dtype=jnp.float32)
    y_small = jax.block_until_ready(model_forward(x_small, w1, w2, w3))
    assert y_small.shape == (B, 1)
    assert jnp.allclose(y_small, x_small * 6.0, rtol=1e-6, atol=1e-6)

    # Medium case: n not a multiple of 128 -> exercises the minimal-pad path.
    B_mid = 200_000
    x_mid = jax.random.normal(k2, (B_mid, 1), dtype=jnp.float32)
    y_mid = jax.block_until_ready(model_forward(x_mid, w1, w2, w3))
    assert y_mid.shape == (B_mid, 1)
    assert jnp.allclose(y_mid, x_mid * 6.0, rtol=1e-6, atol=1e-6)

    # Large case: n % 128 == 0 -> zero-copy fast path, multi-tile grid with a
    # partial (masked) final block: rows = 8292 > tile_rows = 8192.
    B_big = (_MAX_TILE_ROWS + 100) * _LANES
    x_big = jax.random.normal(k3, (B_big, 1), dtype=jnp.float32)
    y_big = jax.block_until_ready(model_forward(x_big, w1, w2, w3))
    assert y_big.shape == (B_big, 1)
    assert jnp.allclose(y_big, x_big * 6.0, rtol=1e-6, atol=1e-6)

    print("KERNEL_OK")
</pallas_src>

<mosaic_0001>
module attributes {stable_mosaic.version = 11 : i64} {
  func.func @_scale_kernel(%arg0: i32, %arg1: memref<1xf32, #tpu.memory_space<smem>>, %arg2: memref<1x128xf32, #tpu.memory_space<vmem>>, %arg3: memref<1x128xf32, #tpu.memory_space<vmem>>) attributes {dimension_semantics = [#tpu.dimension_semantics<parallel>], iteration_bounds = array<i64: 1>, scalar_prefetch = 0 : i64, scratch_operands = 0 : i64, tpu.core_type = #tpu.core_type<tc>, window_params = [{transform_indices = @transform_0, window_bounds = array<i64: 1>}, {transform_indices = @transform_1, window_bounds = array<i64: 1, 128>}, {transform_indices = @transform_2, window_bounds = array<i64: 1, 128>}]} {
    %c0 = arith.constant 0 : index
    %c0_0 = arith.constant 0 : index
    %0 = vector.load %arg2[%c0, %c0_0] : memref<1x128xf32, #tpu.memory_space<vmem>>, vector<1x128xf32>
    %c0_1 = arith.constant 0 : index
    %1 = memref.load %arg1[%c0_1] : memref<1xf32, #tpu.memory_space<smem>>
    %2 = vector.broadcast %1 : f32 to vector<1x128xf32>
    %3 = arith.mulf %0, %2 : vector<1x128xf32>
    %c0_2 = arith.constant 0 : index
    %c0_3 = arith.constant 0 : index
    %4 = vector.load %arg3[%c0_2, %c0_3] : memref<1x128xf32, #tpu.memory_space<vmem>>, vector<1x128xf32>
    tpu.vector_store %arg3[%c0_2, %c0_3], %3 {strides = array<i32>} : memref<1x128xf32, #tpu.memory_space<vmem>>, vector<1x128xf32>,
    return
  }
  func.func @transform_0(%arg0: i32) -> i32 {
    %c0_i32 = arith.constant 0 : i32
    %c0_i32_0 = arith.constant 0 : i32
    return %c0_i32 : i32
  }
  func.func @transform_1(%arg0: i32) -> (i32, i32) {
    %c0_i32 = arith.constant 0 : i32
    %c0_i32_0 = arith.constant 0 : i32
    return %arg0, %c0_i32 : i32, i32
  }
  func.func @transform_2(%arg0: i32) -> (i32, i32) {
    %c0_i32 = arith.constant 0 : i32
    %c0_i32_0 = arith.constant 0 : i32
    return %arg0, %c0_i32 : i32, i32
  }
}

</mosaic_0001>

<llo_original>
// kernel: tpu_custom_call.1
$region0: #{tpu_custom_call.1}
  #allocation0 [shape = 'u32[]', space=smem, size = 0x4, offset = 0x4, fixed_abs, tag = 'smem constant byte address 0x4 - core index']
  #allocation1 [shape = 'u32[144,128]{1,0:T(1,128)}', space=vmem, size = 0x12000, scoped, tag = 'internal scratch']
  #allocation2 [shape = 'f32[1]{0:T(128)S(6)}', space=smem, size = 0x200, scoped, tag = 'scoped memory for tpu_custom_call.1']
  %s0 = inlined_call_operand.<no memory space> [shape: f32[1], index: 0, kind: input, shape index: {}]
  %s1 = inlined_call_operand.vmem [shape: f32[1,128], index: 1, kind: input, shape index: {}]
  %s2 = inlined_call_operand.hbm [shape: f32[1,128], index: 2, kind: output, shape index: {}]
  %s3 = sld [smem:[#allocation0]]
  $region18: #{tpu_custom_call.1} parent=0
    _
  %s5 = ssub.s32 1, %s3
  %s6 = scalar_select 0, %s5, %s3
  %7 = sst [smem:[#allocation2]] %s0
  $region1: #{tpu_custom_call.1} parent=0
    #allocation3 [shape = 'u8[512]{0}', space=vmem, size = 0x400, scoped, tag = 'output window, operand 0, single buffered']
    #allocation4 [shape = 's32[1]{0}', space=sflag, size = 0x4, scoped, tag = 'scoped memory for tpu_custom_call.1']
    %8 = vsyncpa [#allocation4], 0
    // Predicated region
    $region2: #{tpu_custom_call.1} parent=1 // pred_check
      _
    $region3: #{tpu_custom_call.1} parent=1 // pred_check_branch
      %10 = sbr.rel (0) target = $region5
    $region4: #{tpu_custom_call.1} parent=1 // pred_region
      _
    $region5: #{tpu_custom_call.1} parent=1 // pred_fallthru
      _
    // Predicated region
    $region6: #{tpu_custom_call.1} parent=1 // pred_check
      _
    $region7: #{tpu_custom_call.1} parent=1 // pred_check_branch
      %12 = sbr.rel (0) target = $region9
    $region8: #{tpu_custom_call.1} parent=1 // pred_region
      _
    $region9: #{tpu_custom_call.1} parent=1 // pred_fallthru
      _
    %v13 = vld [vmem:[%s1] sm:$0x1]
    %s14 = sld [smem:[#allocation2]]
    %v15 = vstv %s14
    %v16 = vmul.f32 %v13, %v15
    %17 = vst [vmem:[#allocation3] sm:$0x1] %v16
    // Predicated region
    $region10: #{tpu_custom_call.1} parent=1 // pred_check
      _
    $region11: #{tpu_custom_call.1} parent=1 // pred_check_branch
      %19 = sbr.rel (0) target = $region13
    $region12: #{tpu_custom_call.1} parent=1 // pred_region
      %s21 = ssub.s32 16, 16
      %22 = vsyncadd [#allocation4], %s21
      %s24 = sshll.u32 [#allocation3], 4
      %s25 = int_to_ptr.vmem [resolvable:$true] %s24
      %27 = dma.vmem_to_hbm [thread:$0]  %s25, 16, %s2, [#allocation4]
    $region13: #{tpu_custom_call.1} parent=1 // pred_fallthru
      _
    // Predicated region
    $region14: #{tpu_custom_call.1} parent=1 // pred_check
      _
    $region15: #{tpu_custom_call.1} parent=1 // pred_check_branch
      %29 = sbr.rel (0) target = $region17
    $region16: #{tpu_custom_call.1} parent=1 // pred_region
      %30 = dma.done [#allocation4], 16
    $region17: #{tpu_custom_call.1} parent=1 // pred_fallthru
      _
    %31 = vsyncpa [#allocation4], 1

</llo_original>
